<compile_context>
chip_gen: v6e
topology: v6e:2x2x1
jax: 0.10.0
libtpu: 0.0.40
codegen_flags: <defaults>
</compile_context>

<pallas_src>
import functools

import numpy as np
import jax
import jax.numpy as jnp
from jax.experimental import pallas as pl
from jax.experimental.pallas import tpu as pltpu


def make_m_list(cls_num_list, max_m=0.5):
    """Deterministic margin list, same math as the PyTorch __init__."""
    m = 1.0 / np.sqrt(np.sqrt(np.asarray(cls_num_list, dtype=np.float64)))
    m = m * (max_m / np.max(m))
    return jnp.asarray(m, dtype=jnp.float32)


def _round_up(a, b):
    return (a + b - 1) // b * b


def _ldam_kernel(x_ref, tgt_ref, m_ref, out_ref, *, s, n_rows, tile_n):
    # x_ref:  (TN, Cp) native-dtype logits (pad cols pre-filled with -1e30)
    # tgt_ref:(TN, 1)  i32 target class index per row
    # m_ref:  (1, Cp)  f32 per-class margins (pad cols are 0)
    # out_ref:(1, 8, 128) f32 per-tile partial loss sum, broadcast lane-dense
    x = x_ref[...].astype(jnp.float32)          # cast in-kernel (bf16 path)
    tgt = tgt_ref[...]                          # (TN, 1)
    m = m_ref[...]                              # (1, Cp)

    col = jax.lax.broadcasted_iota(jnp.int32, x.shape, 1)   # (TN, Cp)
    onehot = col == tgt                                      # (TN, Cp) bool

    # where(onehot, x - batch_m, x) == x - where(onehot, m, 0)
    # (batch_m is only subtracted at the target column, where it equals m[c]).
    logits = (x - jnp.where(onehot, m, 0.0)) * s             # (TN, Cp)

    # cross_entropy (reduction='mean', weight=None):
    #   loss_i = logsumexp(logits_i) - logits_i[target_i]
    mx = jnp.max(logits, axis=1, keepdims=True)              # (TN, 1)
    lse = mx + jnp.log(jnp.sum(jnp.exp(logits - mx), axis=1, keepdims=True))
    tgt_logit = jnp.sum(jnp.where(onehot, logits, 0.0), axis=1, keepdims=True)
    losses = lse - tgt_logit                                  # (TN, 1)

    if n_rows % tile_n != 0:
        # last tile is partial: rows >= n_rows hold undefined data -> zero them
        row = pl.program_id(0) * tile_n + jax.lax.broadcasted_iota(
            jnp.int32, losses.shape, 0)
        losses = jnp.where(row < n_rows, losses, 0.0)

    # lane-dense, unmasked store of the per-tile partial sum
    out_ref[...] = jnp.full(out_ref.shape, jnp.sum(losses), dtype=jnp.float32)


def ldam_loss(x, target, m_list, s=30.0, tile_n=None):
    """LDAM loss forward. x: (N, C) float, target: (N,) int, m_list: (C,) f32."""
    # TODO(synk): `weight` (per-class CE weights) not implemented; module default is None.
    n, c = x.shape
    c_pad = _round_up(c, 128)

    if c_pad != c:
        # Pad the lane (class) axis to a 128 multiple; -1e30 makes pad columns
        # vanish in the log-sum-exp with no in-kernel masking.
        x = jnp.pad(x, ((0, 0), (0, c_pad - c)), constant_values=-1e30)
        m2d = jnp.pad(m_list.astype(jnp.float32), (0, c_pad - c)).reshape(1, c_pad)
    else:
        m2d = m_list.astype(jnp.float32).reshape(1, c_pad)
    # NOTE: x keeps its native dtype (bf16 stays bf16 in HBM); cast is in-kernel.

    tgt2d = target.astype(jnp.int32).reshape(n, 1)

    itemsize = jnp.dtype(x.dtype).itemsize
    if tile_n is None:
        # ~2 MiB per x buffer (double-buffered -> ~4 MiB), safe on all
        # generations (v5e 16 MiB default scoped VMEM, v7x 64 MiB physical).
        cap = max(8, ((2 * 1024 * 1024) // (c_pad * itemsize)) // 8 * 8)
        tile_n = min(_round_up(n, 8), cap, 1024)
    tile_n = max(8, _round_up(int(tile_n), 8))
    g = pl.cdiv(n, tile_n)

    kernel = functools.partial(_ldam_kernel, s=float(s), n_rows=n, tile_n=tile_n)

    cost = pl.CostEstimate(
        flops=8 * n * c_pad,
        transcendentals=n * c_pad,
        bytes_accessed=n * c_pad * itemsize + n * 4 + c_pad * 4 + g * 8 * 128 * 4,
    )

    out = pl.pallas_call(
        kernel,
        out_shape=jax.ShapeDtypeStruct((g, 8, 128), jnp.float32),
        grid=(g,),
        in_specs=[
            pl.BlockSpec((tile_n, c_pad), lambda i: (i, 0)),
            pl.BlockSpec((tile_n, 1), lambda i: (i, 0)),
            pl.BlockSpec((1, c_pad), lambda i: (0, 0)),
        ],
        out_specs=pl.BlockSpec((1, 8, 128), lambda i: (i, 0, 0)),
        compiler_params=pltpu.CompilerParams(
            dimension_semantics=("parallel",),
            vmem_limit_bytes=32 * 1024 * 1024,
        ),
        cost_estimate=cost,
    )(x, tgt2d, m2d)

    # per-tile partial sums -> mean over the batch
    return jnp.sum(out[:, 0, 0]) / n


def ldam_loss_ref(x, target, m_list, s=30.0):
    """Pure-JAX reference for verification."""
    n, c = x.shape
    onehot = jax.nn.one_hot(target, c, dtype=jnp.float32)
    batch_m = (onehot * m_list[None, :]).sum(axis=1, keepdims=True)
    out = jnp.where(onehot > 0, x - batch_m, x) * s
    logz = jax.scipy.special.logsumexp(out, axis=1)
    tgt_logit = (out * onehot).sum(axis=1)
    return jnp.mean(logz - tgt_logit)


if __name__ == "__main__":
    key = jax.random.PRNGKey(0)

    # Case 1: tiny shapes matching the module (batch=8, num_classes=4).
    N, C = 8, 4
    cls_num_list = [50, 100, 20, 30]
    m_list = make_m_list(cls_num_list, max_m=0.5)
    kx, kt, key = jax.random.split(key, 3)
    x = jax.random.normal(kx, (N, C), dtype=jnp.float32)
    target = jax.random.randint(kt, (N,), 0, C, dtype=jnp.int32)

    loss = jax.block_until_ready(ldam_loss(x, target, m_list, s=30.0))
    ref = ldam_loss_ref(x, target, m_list, s=30.0)
    assert jnp.allclose(loss, ref, rtol=1e-5, atol=1e-5), (loss, ref)

    # Case 2: multi-tile grid with a partial last tile + class padding (10->128).
    N2, C2 = 50, 10
    cls2 = [100, 80, 60, 50, 40, 30, 20, 15, 10, 5]
    m_list2 = make_m_list(cls2, max_m=0.5)
    kx2, kt2, key = jax.random.split(key, 3)
    x2 = jax.random.normal(kx2, (N2, C2), dtype=jnp.float32)
    t2 = jax.random.randint(kt2, (N2,), 0, C2, dtype=jnp.int32)

    loss2 = jax.block_until_ready(ldam_loss(x2, t2, m_list2, s=30.0, tile_n=8))
    ref2 = ldam_loss_ref(x2, t2, m_list2, s=30.0)
    assert jnp.allclose(loss2, ref2, rtol=1e-5, atol=1e-5), (loss2, ref2)

    # Case 3: bf16 logits stay bf16 through HBM; kernel casts to f32 internally.
    x_bf = x.astype(jnp.bfloat16)
    loss3 = jax.block_until_ready(ldam_loss(x_bf, target, m_list, s=30.0))
    ref3 = ldam_loss_ref(x_bf.astype(jnp.float32), target, m_list, s=30.0)
    assert jnp.allclose(loss3, ref3, rtol=1e-5, atol=1e-5), (loss3, ref3)

    print("KERNEL_OK")
</pallas_src>

<mosaic_0001>
module attributes {stable_mosaic.version = 11 : i64} {
  func.func @_ldam_kernel(%arg0: i32, %arg1: memref<8x128xf32, #tpu.memory_space<vmem>>, %arg2: memref<8x1xi32, #tpu.memory_space<vmem>>, %arg3: memref<1x128xf32, #tpu.memory_space<vmem>>, %arg4: memref<1x8x128xf32, #tpu.memory_space<vmem>>) attributes {dimension_semantics = [#tpu.dimension_semantics<parallel>], iteration_bounds = array<i64: 1>, scalar_prefetch = 0 : i64, scratch_operands = 0 : i64, tpu.core_type = #tpu.core_type<tc>, window_params = [{transform_indices = @transform_0, window_bounds = array<i64: 8, 128>}, {transform_indices = @transform_1, window_bounds = array<i64: 8, 1>}, {pipeline_mode = #tpu.pipeline_mode<synchronous>, transform_indices = @transform_2, window_bounds = array<i64: 1, 128>}, {transform_indices = @transform_3, window_bounds = array<i64: 1, 8, 128>}]} {
    %c0 = arith.constant 0 : index
    %c0_0 = arith.constant 0 : index
    %0 = vector.load %arg1[%c0, %c0_0] : memref<8x128xf32, #tpu.memory_space<vmem>>, vector<8x128xf32>
    %c0_1 = arith.constant 0 : index
    %c0_2 = arith.constant 0 : index
    %1 = vector.load %arg2[%c0_1, %c0_2] : memref<8x1xi32, #tpu.memory_space<vmem>>, vector<8x1xi32>
    %c0_3 = arith.constant 0 : index
    %c0_4 = arith.constant 0 : index
    %2 = vector.load %arg3[%c0_3, %c0_4] : memref<1x128xf32, #tpu.memory_space<vmem>>, vector<1x128xf32>
    %3 = tpu.iota {dimensions = array<i32: 1>} : vector<8x128xi32>
    %4 = vector.broadcast %1 : vector<8x1xi32> to vector<8x128xi32>
    %5 = arith.cmpi eq, %3, %4 : vector<8x128xi32>
    %cst = arith.constant 0.000000e+00 : f32
    %6 = vector.shape_cast %2 : vector<1x128xf32> to vector<1x128xf32>
    %7 = vector.broadcast %6 : vector<1x128xf32> to vector<8x128xf32>
    %8 = vector.broadcast %cst : f32 to vector<8x128xf32>
    %9 = arith.select %5, %7, %8 : vector<8x128xi1>, vector<8x128xf32>
    %10 = arith.subf %0, %9 : vector<8x128xf32>
    %cst_5 = arith.constant 3.000000e+01 : f32
    %11 = vector.broadcast %cst_5 : f32 to vector<8x128xf32>
    %12 = arith.mulf %10, %11 : vector<8x128xf32>
    %cst_6 = arith.constant dense<0xFF800000> : vector<8xf32>
    %13 = vector.multi_reduction <maximumf>, %12, %cst_6 [1] : vector<8x128xf32> to vector<8xf32>
    %14 = vector.shape_cast %13 : vector<8xf32> to vector<8x1xf32>
    %15 = vector.broadcast %14 : vector<8x1xf32> to vector<8x128xf32>
    %16 = arith.subf %12, %15 : vector<8x128xf32>
    %17 = math.exp %16 : vector<8x128xf32>
    %cst_7 = arith.constant dense<0.000000e+00> : vector<8xf32>
    %18 = vector.multi_reduction <add>, %17, %cst_7 [1] : vector<8x128xf32> to vector<8xf32>
    %19 = vector.shape_cast %18 : vector<8xf32> to vector<8x1xf32>
    %20 = math.log %19 : vector<8x1xf32>
    %21 = arith.addf %14, %20 : vector<8x1xf32>
    %cst_8 = arith.constant 0.000000e+00 : f32
    %22 = vector.broadcast %cst_8 : f32 to vector<8x128xf32>
    %23 = arith.select %5, %12, %22 : vector<8x128xi1>, vector<8x128xf32>
    %cst_9 = arith.constant dense<0.000000e+00> : vector<8xf32>
    %24 = vector.multi_reduction <add>, %23, %cst_9 [1] : vector<8x128xf32> to vector<8xf32>
    %25 = vector.shape_cast %24 : vector<8xf32> to vector<8x1xf32>
    %26 = arith.subf %21, %25 : vector<8x1xf32>
    %27 = vector.shape_cast %26 : vector<8x1xf32> to vector<1x8x1xf32>
    %cst_10 = arith.constant dense<0.000000e+00> : vector<1xf32>
    %28 = vector.multi_reduction <add>, %27, %cst_10 [1, 2] : vector<1x8x1xf32> to vector<1xf32>
    %29 = vector.shape_cast %28 : vector<1xf32> to vector<1x1x1xf32>
    %30 = vector.extract %29[0, 0, 0] : f32 from vector<1x1x1xf32>
    %31 = vector.broadcast %30 : f32 to vector<1x8x128xf32>
    %c0_11 = arith.constant 0 : index
    %c0_12 = arith.constant 0 : index
    %c0_13 = arith.constant 0 : index
    %32 = vector.load %arg4[%c0_11, %c0_12, %c0_13] : memref<1x8x128xf32, #tpu.memory_space<vmem>>, vector<1x8x128xf32>
    tpu.vector_store %arg4[%c0_11, %c0_12, %c0_13], %31 {strides = array<i32>} : memref<1x8x128xf32, #tpu.memory_space<vmem>>, vector<1x8x128xf32>,
    return
  }
  func.func @transform_0(%arg0: i32) -> (i32, i32) {
    %c0_i32 = arith.constant 0 : i32
    %c0_i32_0 = arith.constant 0 : i32
    return %arg0, %c0_i32 : i32, i32
  }
  func.func @transform_1(%arg0: i32) -> (i32, i32) {
    %c0_i32 = arith.constant 0 : i32
    %c0_i32_0 = arith.constant 0 : i32
    return %arg0, %c0_i32 : i32, i32
  }
  func.func @transform_2(%arg0: i32) -> (i32, i32) {
    %c0_i32 = arith.constant 0 : i32
    %c0_i32_0 = arith.constant 0 : i32
    %c0_i32_1 = arith.constant 0 : i32
    return %c0_i32, %c0_i32_0 : i32, i32
  }
  func.func @transform_3(%arg0: i32) -> (i32, i32, i32) {
    %c0_i32 = arith.constant 0 : i32
    %c0_i32_0 = arith.constant 0 : i32
    %c0_i32_1 = arith.constant 0 : i32
    return %arg0, %c0_i32, %c0_i32_0 : i32, i32, i32
  }
}

</mosaic_0001>

<llo_original>
// kernel: tpu_custom_call.1
$region0: #{tpu_custom_call.1}
  #allocation0 [shape = 'u32[]', space=smem, size = 0x4, offset = 0x4, fixed_abs, tag = 'smem constant byte address 0x4 - core index']
  #allocation1 [shape = 'u32[144,128]{1,0:T(1,128)}', space=vmem, size = 0x12000, scoped, tag = 'internal scratch']
  %s0 = inlined_call_operand.vmem [shape: f32[8,128], index: 0, kind: input, shape index: {}]
  %s1 = inlined_call_operand.vmem [shape: s32[8,1], index: 1, kind: input, shape index: {}]
  %s2 = inlined_call_operand.vmem [shape: f32[1,128], index: 2, kind: input, shape index: {}]
  %s3 = inlined_call_operand.hbm [shape: f32[1,8,128], index: 3, kind: output, shape index: {}]
  %s4 = sld [smem:[#allocation0]]
  $region22: #{tpu_custom_call.1} parent=0
    _
  %s6 = ssub.s32 1, %s4
  %s7 = scalar_select 0, %s6, %s4
  $region1: #{tpu_custom_call.1} parent=0
    #allocation2 [shape = 'u8[4096]{0}', space=vmem, size = 0x1000, scoped, tag = 'output window, operand 0, single buffered']
    #allocation3 [shape = 's32[1]{0}', space=sflag, size = 0x4, scoped, tag = 'scoped memory for tpu_custom_call.1']
    %8 = vsyncpa [#allocation3], 0
    // Predicated region
    $region2: #{tpu_custom_call.1} parent=1 // pred_check
      _
    $region3: #{tpu_custom_call.1} parent=1 // pred_check_branch
      %10 = sbr.rel (0) target = $region5
    $region4: #{tpu_custom_call.1} parent=1 // pred_region
      _
    $region5: #{tpu_custom_call.1} parent=1 // pred_fallthru
      _
    // Predicated region
    $region6: #{tpu_custom_call.1} parent=1 // pred_check
      _
    $region7: #{tpu_custom_call.1} parent=1 // pred_check_branch
      %12 = sbr.rel (0) target = $region9
    $region8: #{tpu_custom_call.1} parent=1 // pred_region
      _
    $region9: #{tpu_custom_call.1} parent=1 // pred_fallthru
      _
    // Predicated region
    $region10: #{tpu_custom_call.1} parent=1 // pred_check
      _
    $region11: #{tpu_custom_call.1} parent=1 // pred_check_branch
      %14 = sbr.rel (0) target = $region13
    $region12: #{tpu_custom_call.1} parent=1 // pred_region
      _
    $region13: #{tpu_custom_call.1} parent=1 // pred_fallthru
      _
    %v15 = vld [vmem:[%s0] sm:$0xff]
    %v16 = vld [vmem:[%s1] sm:$0xff]
    %v17 = vld [vmem:[%s2] sm:$0x1]
    %v18 = vlaneseq
    %v19 = vand.u32 %v18, 127
    %20 = vset.pattern.permute.xlu0 0
    %21 = vperm.xlu0 %20, %v16
    %v22 = vpop.permute.xlu0 %21
    %vm23 = vcmp.eq.s32.totalorder %v19, %v22
    %v25 = vlaneseq
    %v26 = vshrl.u32 %v25, 7
    %v27 = vsub.s32 0, %v26
    %v28 = vrot.slane %v17, %v27
    %v30 = vsel %vm23, %v28, 0.0
    %v31 = vsub.f32 %v15, %v30
    %v32 = vmul.f32 %v31, 30.0
    %33 = vmax.xlane.f32.xlu0 %v32
    %v34 = vpop.xlane.xlu0 %33
    %v35 = vsub.f32 %v32, %v34
    %v36 = vmul.f32 %v35, 1.442695
    %v37 = vpow.pop %v36
    %38 = vadd.xlane.f32.xlu0 %v37
    %v39 = vpop.xlane.xlu0 %38
    %v40 = vlog2.pop %v39
    %v41 = vmul.f32 %v40, 0.6931472
    %v42 = vadd.f32 %v34, %v41
    %v43 = vsel %vm23, %v32, 0.0
    %44 = vadd.xlane.f32.xlu0 %v43
    %v45 = vpop.xlane.xlu0 %44
    %v46 = vsub.f32 %v42, %v45
    %vm47 = vcmask 7168
    %v48 = vsel %vm47, %v46, 0.0
    %49 = vadd.xlane.f32.xlu0 %v48
    %v50 = vpop.xlane.xlu0 %49
    %v51 = vrot.slane %v50, 4
    %v52 = vadd.f32 %v50, %v51
    %v53 = vrot.slane %v52, 2
    %v54 = vadd.f32 %v52, %v53
    %v55 = vrot.slane %v54, 1
    %v56 = vadd.f32 %v54, %v55
    %s57 = vtos %v56
    %v58 = vstv %s57
    %59 = vst [vmem:[#allocation2] sm:$0xff] %v58
    // Predicated region
    $region14: #{tpu_custom_call.1} parent=1 // pred_check
      _
    $region15: #{tpu_custom_call.1} parent=1 // pred_check_branch
      %61 = sbr.rel (0) target = $region17
    $region16: #{tpu_custom_call.1} parent=1 // pred_region
      %s63 = ssub.s32 128, 128
      %64 = vsyncadd [#allocation3], %s63
      %s66 = sshll.u32 [#allocation2], 4
      %s67 = int_to_ptr.vmem [resolvable:$true] %s66
      %69 = dma.vmem_to_hbm [thread:$0]  %s67, 128, %s3, [#allocation3]
    $region17: #{tpu_custom_call.1} parent=1 // pred_fallthru
      _
    // Predicated region
    $region18: #{tpu_custom_call.1} parent=1 // pred_check
      _
    $region19: #{tpu_custom_call.1} parent=1 // pred_check_branch
      %71 = sbr.rel (0) target = $region21
    $region20: #{tpu_custom_call.1} parent=1 // pred_region
      %72 = dma.done [#allocation3], 128
    $region21: #{tpu_custom_call.1} parent=1 // pred_fallthru
      _
    %73 = vsyncpa [#allocation3], 1

</llo_original>
